<compile_context>
chip_gen: v7x
topology: tpu7x:2x2x1
jax: 0.10.0
libtpu: 0.0.40
codegen_flags: <defaults>
</compile_context>

<pallas_src>
import functools

import jax
import jax.numpy as jnp
from jax.experimental import pallas as pl
from jax.experimental.pallas import tpu as pltpu

GAMMA = 1.5
ALPHA = 0.25

LANES = 128            # vreg lane width -- last dim of every block
STRIP = 256            # rows per in-kernel compute strip (bounds vreg live ranges)
MAX_ROW_TILE = 8192    # rows per DMA block: (8192,128) f32 = 4 MiB per input block
NUM_PARTIALS = 2       # leading "parallel" grid axis; sharded across TCs on v7x,
                       # a free extra loop iteration on 1-TC chips (no padding cost)
MIN_BLOCKS_PER_CHUNK = 4   # keeps the plain-JAX ragged tail small vs. the main grid


def _focal_elementwise(x, y, gamma, alpha, approx_recip=False):
    """Per-element focal BCE-with-logits loss (float32 in / float32 out).

    Matches the PyTorch module for arbitrary (soft) labels y in [0, 1]:
      bce  = max(x,0) - x*y + log1p(exp(-|x|))          (BCEWithLogitsLoss, 'none')
      p    = sigmoid(x)
      p_t  = y*p + (1-y)*(1-p)
      loss = bce * (y*a + (1-y)*(1-a)) * (1 - p_t)**gamma
    """
    e = jnp.exp(-jnp.abs(x))                               # EUP: exp (shared)
    bce = jnp.maximum(x, 0.0) - x * y + jnp.log1p(e)       # EUP: log1p
    d = 1.0 + e
    num = jnp.where(x >= 0.0, 1.0, e)                      # sigmoid(x) = num / d
    if approx_recip:
        p = num * pl.reciprocal(d, approx=True)            # EUP vrcp (kernel-only)
    else:
        p = num / d
    # z = 1 - p_t  ==  p + y*(1 - 2p)   (exact algebra, valid for soft labels)
    z = jnp.maximum(p + y * (1.0 - 2.0 * p), 0.0)
    if gamma == 1.5:
        mf = z * jnp.sqrt(z)                               # EUP: sqrt, avoids pow
    elif gamma == 2.0:
        mf = z * z
    elif gamma == 1.0:
        mf = z
    else:
        mf = z ** gamma
    af = (1.0 - alpha) + y * (2.0 * alpha - 1.0)           # == y*a + (1-y)*(1-a)
    return bce * af * mf


def _accumulate(acc_ref, loss):
    """Partially reduce a (r, 128) strip into the (8, 128) accumulator (VPU adds)."""
    r = loss.shape[0]
    r8 = (r // 8) * 8
    if r8:
        acc_ref[...] += loss[:r8].reshape(-1, 8, LANES).sum(axis=0)
    if r8 != r:                                   # static sub-8-row remainder
        acc_ref[0:r - r8, :] += loss[r8:]


def _focal_loss_kernel(pred_ref, true_ref, out_ref, acc_ref, *,
                       gamma, alpha, row_tile, approx_recip):
    j = pl.program_id(1)                          # sequential (reduction) axis

    @pl.when(j == 0)
    def _():
        acc_ref[...] = jnp.zeros_like(acc_ref)

    def strip(r0, nrows):
        x = pred_ref[pl.ds(r0, nrows), :].astype(jnp.float32)
        y = true_ref[pl.ds(r0, nrows), :].astype(jnp.float32)
        _accumulate(acc_ref, _focal_elementwise(x, y, gamma, alpha, approx_recip))

    # Strip-mine the (row_tile, 128) block so intermediates stay in vregs.
    n_full = row_tile // STRIP
    rem = row_tile - n_full * STRIP
    if n_full:
        @pl.loop(0, n_full)
        def _(s):
            strip(pl.multiple_of(s * STRIP, STRIP), STRIP)
    if rem:
        strip(n_full * STRIP, rem)                # static trailing strip

    @pl.when(j == pl.num_programs(1) - 1)
    def _():
        out_ref[...] = acc_ref[...].reshape(1, 8, LANES)


def _choose_tiling(rows, max_row_tile, num_partials):
    """Returns (row_tile, num_chunks, inner); the grid covers exactly
    num_chunks * inner * row_tile rows (no partial blocks, no padding)."""
    if rows <= max_row_tile:
        return rows, 1, 1                         # one full-array block
    row_tile = max(16, (max_row_tile // 16) * 16)  # sublane tiling (f32 & bf16 safe)
    num_chunks = max(1, int(num_partials))
    # Shrink the block for mid-size inputs so every chunk gets several blocks
    # and the plain-JAX tail stays a small fraction of the input.
    while row_tile > STRIP and rows < MIN_BLOCKS_PER_CHUNK * num_chunks * row_tile:
        row_tile //= 2
    num_blocks = rows // row_tile
    if num_blocks < num_chunks:
        num_chunks = 1
    inner = num_blocks // num_chunks
    return row_tile, num_chunks, inner


def focal_loss(pred, true, gamma=GAMMA, alpha=ALPHA, *, reduction="mean",
               max_row_tile=MAX_ROW_TILE, num_partials=NUM_PARTIALS,
               approx_recip=False):
    """FocalLoss(BCEWithLogitsLoss(reduction='mean')) forward over all elements."""
    assert pred.shape == true.shape
    total = int(pred.size)
    assert total > 0

    flat_pred = pred.reshape(-1)                  # free bitcast, no copy
    flat_true = true.reshape(-1)

    rem_lanes = total % LANES
    if rem_lanes:
        # Only copy in the whole path: pad to a 128-lane multiple with a
        # loss-neutral pair (x=-100 -> focal loss exactly 0 with y=0), so the
        # kernel never needs a mask for these elements.
        pad = LANES - rem_lanes
        flat_pred = jnp.pad(flat_pred, (0, pad), constant_values=-100.0)
        flat_true = jnp.pad(flat_true, (0, pad), constant_values=0.0)

    rows = flat_pred.shape[0] // LANES
    pred2 = flat_pred.reshape(rows, LANES)        # free
    true2 = flat_true.reshape(rows, LANES)

    row_tile, num_chunks, inner = _choose_tiling(rows, max_row_tile, num_partials)
    main_rows = num_chunks * inner * row_tile     # rows covered by the kernel grid

    kernel = functools.partial(
        _focal_loss_kernel, gamma=float(gamma), alpha=float(alpha),
        row_tile=row_tile, approx_recip=approx_recip)

    # 2 inputs x 2 pipeline buffers per block, plus generous headroom; capped
    # below v7x's 64 MiB physical per-TC VMEM.
    block_bytes = row_tile * LANES * pred2.dtype.itemsize
    vmem_limit = int(min(48 << 20, 4 * block_bytes + (16 << 20)))

    in_map = lambda i, j: (i * inner + j, 0)
    partials = pl.pallas_call(
        kernel,
        out_shape=jax.ShapeDtypeStruct((num_chunks, 8, LANES), jnp.float32),
        grid_spec=pltpu.PrefetchScalarGridSpec(
            num_scalar_prefetch=0,
            grid=(num_chunks, inner),
            in_specs=[
                pl.BlockSpec((row_tile, LANES), in_map),
                pl.BlockSpec((row_tile, LANES), in_map),
            ],
            out_specs=pl.BlockSpec((1, 8, LANES), lambda i, j: (i, 0, 0)),
            scratch_shapes=[pltpu.VMEM((8, LANES), jnp.float32)],
        ),
        compiler_params=pltpu.CompilerParams(
            dimension_semantics=("parallel", "arbitrary"),
            vmem_limit_bytes=vmem_limit),
    )(pred2, true2)

    loss_sum = jnp.sum(partials, dtype=jnp.float32)

    if main_rows < rows:
        # Ragged row tail (< one block per chunk): fused XLA on a small slice,
        # so the kernel never sees partial blocks or per-element masks.
        tx = pred2[main_rows:].astype(jnp.float32)
        ty = true2[main_rows:].astype(jnp.float32)
        loss_sum = loss_sum + jnp.sum(
            _focal_elementwise(tx, ty, float(gamma), float(alpha)))

    if reduction == "sum":
        return loss_sum
    # TODO(synk): reduction='none' (elementwise loss output) is not implemented
    # in the reduction kernel; only 'mean' (BCEWithLogitsLoss default) / 'sum'.
    return loss_sum / jnp.float32(total)


def focal_loss_ref(pred, true, gamma=GAMMA, alpha=ALPHA):
    """Pure-JAX reference (mirrors the PyTorch module)."""
    x = pred.astype(jnp.float32)
    y = true.astype(jnp.float32)
    bce = jnp.maximum(x, 0.0) - x * y + jnp.log1p(jnp.exp(-jnp.abs(x)))
    p = jax.nn.sigmoid(x)
    p_t = y * p + (1.0 - y) * (1.0 - p)
    af = y * alpha + (1.0 - y) * (1.0 - alpha)
    mf = (1.0 - p_t) ** gamma
    return jnp.mean(bce * af * mf)


if __name__ == "__main__":
    key = jax.random.PRNGKey(0)
    k1, k2, k3, k4 = jax.random.split(key, 4)

    # (batch=2, channels=4, 16, 16) logits + binary targets (YOLOv5 obj/cls style).
    pred = jax.random.normal(k1, (2, 4, 16, 16), dtype=jnp.float32) * 2.0
    true = (jax.random.uniform(k2, (2, 4, 16, 16)) > 0.5).astype(jnp.float32)
    out = jax.block_until_ready(focal_loss(pred, true))
    ref = jax.block_until_ready(focal_loss_ref(pred, true))
    assert jnp.allclose(out, ref, rtol=1e-5, atol=1e-6), (out, ref)

    # Non-multiple-of-128 element count -> exercises the loss-neutral lane pad
    # and the sub-8-row accumulator path.
    pred_b = jax.random.normal(k3, (2, 3, 15, 17), dtype=jnp.float32) * 2.0
    true_b = (jax.random.uniform(k4, (2, 3, 15, 17)) > 0.5).astype(jnp.float32)
    out_b = jax.block_until_ready(focal_loss(pred_b, true_b))
    ref_b = jax.block_until_ready(focal_loss_ref(pred_b, true_b))
    assert jnp.allclose(out_b, ref_b, rtol=1e-5, atol=1e-6), (out_b, ref_b)

    # Small max_row_tile override -> exercises the 2-chunk "parallel" axis, the
    # multi-block grid and the plain-JAX ragged tail, with bf16 inputs.
    pred_c = (jax.random.normal(k1, (2, 4, 40, 16), dtype=jnp.float32) * 2.0
              ).astype(jnp.bfloat16)
    true_c = (jax.random.uniform(k2, (2, 4, 40, 16)) > 0.7).astype(jnp.bfloat16)
    out_c = jax.block_until_ready(focal_loss(pred_c, true_c, max_row_tile=16))
    ref_c = jax.block_until_ready(focal_loss_ref(pred_c, true_c))
    assert jnp.allclose(out_c, ref_c, rtol=1e-5, atol=1e-6), (out_c, ref_c)

    # 512-row input -> exercises the pl.loop strip-mining hot path (the one
    # real-size workloads use) inside a single full-array block.
    pred_d = jax.random.normal(k3, (2, 8, 64, 64), dtype=jnp.float32) * 2.0
    true_d = (jax.random.uniform(k4, (2, 8, 64, 64)) > 0.5).astype(jnp.float32)
    out_d = jax.block_until_ready(focal_loss(pred_d, true_d))
    ref_d = jax.block_until_ready(focal_loss_ref(pred_d, true_d))
    assert jnp.allclose(out_d, ref_d, rtol=1e-5, atol=1e-6), (out_d, ref_d)

    print("KERNEL_OK")
</pallas_src>

<mosaic_0001>
module attributes {stable_mosaic.version = 11 : i64} {
  func.func @_focal_loss_kernel(%arg0: i32, %arg1: i32, %arg2: memref<16x128xf32, #tpu.memory_space<vmem>>, %arg3: memref<16x128xf32, #tpu.memory_space<vmem>>, %arg4: memref<1x8x128xf32, #tpu.memory_space<vmem>>, %arg5: memref<8x128xf32, #tpu.memory_space<vmem>>) attributes {dimension_semantics = [#tpu.dimension_semantics<parallel>, #tpu.dimension_semantics<arbitrary>], iteration_bounds = array<i64: 1, 1>, scalar_prefetch = 0 : i64, scratch_operands = 1 : i64, tpu.core_type = #tpu.core_type<tc>, window_params = [{transform_indices = @transform_0, window_bounds = array<i64: 16, 128>}, {transform_indices = @transform_1, window_bounds = array<i64: 16, 128>}, {transform_indices = @transform_2, window_bounds = array<i64: 1, 8, 128>}]} {
    %c0_i32 = arith.constant 0 : i32
    %0 = arith.cmpi eq, %arg1, %c0_i32 : i32
    %1 = arith.extui %0 : i1 to i32
    %c0_i32_0 = arith.constant 0 : i32
    %2 = arith.cmpi ne, %1, %c0_i32_0 : i32
    scf.if %2 {
      %cst_20 = arith.constant 0.000000e+00 : f32
      %46 = vector.broadcast %cst_20 : f32 to vector<8x128xf32>
      %c0_21 = arith.constant 0 : index
      %c0_22 = arith.constant 0 : index
      %47 = vector.load %arg5[%c0_21, %c0_22] : memref<8x128xf32, #tpu.memory_space<vmem>>, vector<8x128xf32>
      tpu.vector_store %arg5[%c0_21, %c0_22], %46 {strides = array<i32>} : memref<8x128xf32, #tpu.memory_space<vmem>>, vector<8x128xf32>,
    } else {
    }
    %c0 = arith.constant 0 : index
    %c0_1 = arith.constant 0 : index
    %3 = vector.load %arg2[%c0, %c0_1] : memref<16x128xf32, #tpu.memory_space<vmem>>, vector<16x128xf32>
    %c0_2 = arith.constant 0 : index
    %c0_3 = arith.constant 0 : index
    %4 = vector.load %arg3[%c0_2, %c0_3] : memref<16x128xf32, #tpu.memory_space<vmem>>, vector<16x128xf32>
    %5 = math.absf %3 : vector<16x128xf32>
    %cst = arith.constant 0.000000e+00 : f32
    %6 = vector.broadcast %cst : f32 to vector<16x128xf32>
    %7 = arith.subf %6, %5 : vector<16x128xf32>
    %8 = math.exp %7 : vector<16x128xf32>
    %cst_4 = arith.constant 0.000000e+00 : f32
    %9 = vector.broadcast %cst_4 : f32 to vector<16x128xf32>
    %10 = arith.maximumf %3, %9 : vector<16x128xf32>
    %11 = arith.mulf %3, %4 : vector<16x128xf32>
    %12 = arith.subf %10, %11 : vector<16x128xf32>
    %13 = math.log1p %8 : vector<16x128xf32>
    %14 = arith.addf %12, %13 : vector<16x128xf32>
    %cst_5 = arith.constant 1.000000e+00 : f32
    %15 = vector.broadcast %cst_5 : f32 to vector<16x128xf32>
    %16 = arith.addf %15, %8 : vector<16x128xf32>
    %cst_6 = arith.constant 0.000000e+00 : f32
    %17 = vector.broadcast %cst_6 : f32 to vector<16x128xf32>
    %18 = arith.cmpf oge, %3, %17 : vector<16x128xf32>
    %cst_7 = arith.constant 1.000000e+00 : f32
    %19 = vector.broadcast %cst_7 : f32 to vector<16x128xf32>
    %20 = arith.select %18, %19, %8 : vector<16x128xi1>, vector<16x128xf32>
    %21 = arith.divf %20, %16 : vector<16x128xf32>
    %cst_8 = arith.constant 2.000000e+00 : f32
    %22 = vector.broadcast %cst_8 : f32 to vector<16x128xf32>
    %23 = arith.mulf %22, %21 : vector<16x128xf32>
    %cst_9 = arith.constant 1.000000e+00 : f32
    %24 = vector.broadcast %cst_9 : f32 to vector<16x128xf32>
    %25 = arith.subf %24, %23 : vector<16x128xf32>
    %26 = arith.mulf %4, %25 : vector<16x128xf32>
    %27 = arith.addf %21, %26 : vector<16x128xf32>
    %cst_10 = arith.constant 0.000000e+00 : f32
    %28 = vector.broadcast %cst_10 : f32 to vector<16x128xf32>
    %29 = arith.maximumf %27, %28 : vector<16x128xf32>
    %30 = math.sqrt %29 : vector<16x128xf32>
    %31 = arith.mulf %29, %30 : vector<16x128xf32>
    %cst_11 = arith.constant -5.000000e-01 : f32
    %32 = vector.broadcast %cst_11 : f32 to vector<16x128xf32>
    %33 = arith.mulf %4, %32 : vector<16x128xf32>
    %cst_12 = arith.constant 7.500000e-01 : f32
    %34 = vector.broadcast %cst_12 : f32 to vector<16x128xf32>
    %35 = arith.addf %34, %33 : vector<16x128xf32>
    %36 = arith.mulf %14, %35 : vector<16x128xf32>
    %37 = arith.mulf %36, %31 : vector<16x128xf32>
    %c0_13 = arith.constant 0 : index
    %c0_14 = arith.constant 0 : index
    %38 = vector.load %arg5[%c0_13, %c0_14] : memref<8x128xf32, #tpu.memory_space<vmem>>, vector<8x128xf32>
    %39 = vector.shape_cast %37 : vector<16x128xf32> to vector<2x8x128xf32>
    %cst_15 = arith.constant dense<0.000000e+00> : vector<8x128xf32>
    %40 = vector.multi_reduction <add>, %39, %cst_15 [0] : vector<2x8x128xf32> to vector<8x128xf32>
    %41 = arith.addf %38, %40 : vector<8x128xf32>
    %c0_16 = arith.constant 0 : index
    %c0_17 = arith.constant 0 : index
    %42 = vector.load %arg5[%c0_16, %c0_17] : memref<8x128xf32, #tpu.memory_space<vmem>>, vector<8x128xf32>
    tpu.vector_store %arg5[%c0_16, %c0_17], %41 {strides = array<i32>} : memref<8x128xf32, #tpu.memory_space<vmem>>, vector<8x128xf32>,
    %c0_i32_18 = arith.constant 0 : i32
    %43 = arith.cmpi eq, %arg1, %c0_i32_18 : i32
    %44 = arith.extui %43 : i1 to i32
    %c0_i32_19 = arith.constant 0 : i32
    %45 = arith.cmpi ne, %44, %c0_i32_19 : i32
    scf.if %45 {
      %c0_20 = arith.constant 0 : index
      %c0_21 = arith.constant 0 : index
      %46 = vector.load %arg5[%c0_20, %c0_21] : memref<8x128xf32, #tpu.memory_space<vmem>>, vector<8x128xf32>
      %47 = vector.shape_cast %46 : vector<8x128xf32> to vector<1x8x128xf32>
      %c0_22 = arith.constant 0 : index
      %c0_23 = arith.constant 0 : index
      %c0_24 = arith.constant 0 : index
      %48 = vector.load %arg4[%c0_22, %c0_23, %c0_24] : memref<1x8x128xf32, #tpu.memory_space<vmem>>, vector<1x8x128xf32>
      tpu.vector_store %arg4[%c0_22, %c0_23, %c0_24], %47 {strides = array<i32>} : memref<1x8x128xf32, #tpu.memory_space<vmem>>, vector<1x8x128xf32>,
    } else {
    }
    return
  }
  func.func @transform_0(%arg0: i32, %arg1: i32) -> (i32, i32) {
    %c1_i32 = arith.constant 1 : i32
    %0 = arith.muli %arg0, %c1_i32 : i32
    %1 = arith.addi %0, %arg1 : i32
    %c0_i32 = arith.constant 0 : i32
    %c0_i32_0 = arith.constant 0 : i32
    return %1, %c0_i32 : i32, i32
  }
  func.func @transform_1(%arg0: i32, %arg1: i32) -> (i32, i32) {
    %c1_i32 = arith.constant 1 : i32
    %0 = arith.muli %arg0, %c1_i32 : i32
    %1 = arith.addi %0, %arg1 : i32
    %c0_i32 = arith.constant 0 : i32
    %c0_i32_0 = arith.constant 0 : i32
    return %1, %c0_i32 : i32, i32
  }
  func.func @transform_2(%arg0: i32, %arg1: i32) -> (i32, i32, i32) {
    %c0_i32 = arith.constant 0 : i32
    %c0_i32_0 = arith.constant 0 : i32
    %c0_i32_1 = arith.constant 0 : i32
    return %arg0, %c0_i32, %c0_i32_0 : i32, i32, i32
  }
}

</mosaic_0001>

<llo_original>
// kernel: tpu_custom_call.1
$region0: #{tpu_custom_call.1}
  #allocation0 [shape = 'u32[]', space=smem, size = 0x4, offset = 0x4, fixed_abs, tag = 'smem constant byte address 0x4 - core index']
  #allocation1 [shape = 'u32[144,128]{1,0:T(1,128)}', space=vmem, size = 0x12000, scoped, tag = 'internal scratch']
  #allocation2 [shape = 'f32[8,128]{1,0:T(8,128)}', space=vmem, size = 0x1000, scoped, tag = 'scratch operand']
  %s0 = inlined_call_operand.hbm [shape: f32[16,128], index: 0, kind: input, shape index: {}]
  %s1 = inlined_call_operand.hbm [shape: f32[16,128], index: 1, kind: input, shape index: {}]
  %s2 = inlined_call_operand.hbm [shape: f32[1,8,128], index: 2, kind: output, shape index: {}]
  %s3 = sld [smem:[#allocation0]]
  $region34: #{tpu_custom_call.1} parent=0
    _
  %s5 = ssub.s32 1, %s3
  %s6 = scalar_select 0, %s5, %s3
  $region1: #{tpu_custom_call.1} parent=0
    #allocation3 [shape = 'u8[8192]{0}', space=vmem, size = 0x2000, scoped, tag = 'input window, operand 0, single buffered']
    #allocation4 [shape = 's32[1]{0}', space=sflag, size = 0x4, scoped, tag = 'scoped memory for tpu_custom_call.1']
    #allocation5 [shape = 's32[1]{0}', space=sflag, size = 0x4, scoped, tag = 'scoped memory for tpu_custom_call.1']
    #allocation6 [shape = 'u8[8192]{0}', space=vmem, size = 0x2000, scoped, tag = 'input window, operand 1, single buffered']
    #allocation7 [shape = 's32[1]{0}', space=sflag, size = 0x4, scoped, tag = 'scoped memory for tpu_custom_call.1']
    #allocation8 [shape = 'u8[4096]{0}', space=vmem, size = 0x1000, scoped, tag = 'output window, operand 0, single buffered']
    %7 = vsyncpa [#allocation4], 0
    %8 = vsyncpa [#allocation7], 0
    %9 = vsyncpa [#allocation5], 0
    // Predicated region
    $region2: #{tpu_custom_call.1} parent=1 // pred_check
      _
    $region3: #{tpu_custom_call.1} parent=1 // pred_check_branch
      %11 = sbr.rel (0) target = $region5
    $region4: #{tpu_custom_call.1} parent=1 // pred_region
      %s12 = sadd.s32 0, 0
      %s13 = smul.u32 2, %s12
      %s15 = ssub.s32 256, 256
      %16 = vsyncadd [#allocation4], %s15
      %s17 = smul.addr %s13, 128
      %s18 = scalar_lea.hbm %s0, %s17
      %s19 = sshll.u32 [#allocation3], 4
      %s20 = int_to_ptr.vmem [resolvable:$true] %s19
      %25 = dma.hbm_to_vmem [thread:$0]  %s18, 256, %s20, [#allocation4], 128, 128, 8
    $region5: #{tpu_custom_call.1} parent=1 // pred_fallthru
      _
    // Predicated region
    $region6: #{tpu_custom_call.1} parent=1 // pred_check
      _
    $region7: #{tpu_custom_call.1} parent=1 // pred_check_branch
      %27 = sbr.rel (0) target = $region9
    $region8: #{tpu_custom_call.1} parent=1 // pred_region
      %s28 = sadd.s32 0, 0
      %s29 = smul.u32 2, %s28
      %s31 = ssub.s32 256, 256
      %32 = vsyncadd [#allocation7], %s31
      %s33 = smul.addr %s29, 128
      %s34 = scalar_lea.hbm %s1, %s33
      %s35 = sshll.u32 [#allocation6], 4
      %s36 = int_to_ptr.vmem [resolvable:$true] %s35
      %41 = dma.hbm_to_vmem [thread:$0]  %s34, 256, %s36, [#allocation7], 128, 128, 8
    $region9: #{tpu_custom_call.1} parent=1 // pred_fallthru
      _
    // Predicated region
    $region10: #{tpu_custom_call.1} parent=1 // pred_check
      _
    $region11: #{tpu_custom_call.1} parent=1 // pred_check_branch
      %43 = sbr.rel (0) target = $region13
    $region12: #{tpu_custom_call.1} parent=1 // pred_region
      %44 = dma.done [#allocation4], 256
    $region13: #{tpu_custom_call.1} parent=1 // pred_fallthru
      _
    // Predicated region
    $region14: #{tpu_custom_call.1} parent=1 // pred_check
      _
    $region15: #{tpu_custom_call.1} parent=1 // pred_check_branch
      %46 = sbr.rel (0) target = $region17
    $region16: #{tpu_custom_call.1} parent=1 // pred_region
      %47 = dma.done [#allocation7], 256
    $region17: #{tpu_custom_call.1} parent=1 // pred_fallthru
      _
    %s48 = sadd.s32 0, 0
    %s49 = smul.u32 2, %s48
    %s50 = sadd.s32 0, 0
    %s51 = smul.u32 2, %s50
    %p52 = scmp.eq.s32.totalorder 0, 0
    // Predicated region
    $region18: #{tpu_custom_call.1} parent=1 // pred_check
      %p53 = pneg %p52
    $region19: #{tpu_custom_call.1} parent=1 // pred_check_branch
      %55 = sbr.rel (%p53) target = $region21
    $region20: #{tpu_custom_call.1} parent=1 // pred_region
      %56 = vst [vmem:[#allocation2] sm:$0xff] 0.0
    $region21: #{tpu_custom_call.1} parent=1 // pred_fallthru
      _
    %v57 = vld [vmem:[#allocation3] sm:$0xff]
    %v58 = vld [vmem:[#allocation3 + $0x8] sm:$0xff]
    %v59 = vld [vmem:[#allocation6] sm:$0xff]
    %v60 = vld [vmem:[#allocation6 + $0x8] sm:$0xff]
    %v61 = vand.u32 2147483647, %v57
    %v62 = vand.u32 2147483647, %v58
    %v63 = vsub.f32 0.0, %v61
    %v64 = vsub.f32 0.0, %v62
    %v65 = vmul.f32 %v63, 1.442695
    %v66 = vpow.pop %v65
    %v67 = vmul.f32 %v64, 1.442695
    %v68 = vpow.pop %v67
    %v69 = vmax.f32 %v57, 0.0
    %v70 = vmax.f32 %v58, 0.0
    %v71 = vmul.f32 %v57, %v59
    %v72 = vmul.f32 %v58, %v60
    %v73 = vsub.f32 %v69, %v71
    %v74 = vsub.f32 %v70, %v72
    %v75 = vadd.f32 %v66, 1.0
    %v76 = vlog2.pop %v75
    %v77 = vmul.f32 %v76, 0.6931472
    %v78 = vmul.f32 -0.5, %v66
    %v79 = vadd.f32 %v78, 1.0
    %v80 = vmul.f32 %v79, %v66
    %v81 = vand.u32 2147483647, %v66
    %vm82 = vcmp.lt.f32.partialorder %v81, 0.0004427343
    %v83 = vsel %vm82, %v80, %v77
    %v84 = vadd.f32 %v68, 1.0
    %v85 = vlog2.pop %v84
    %v86 = vmul.f32 %v85, 0.6931472
    %v87 = vmul.f32 -0.5, %v68
    %v88 = vadd.f32 %v87, 1.0
    %v89 = vmul.f32 %v88, %v68
    %v90 = vand.u32 2147483647, %v68
    %vm91 = vcmp.lt.f32.partialorder %v90, 0.0004427343
    %v92 = vsel %vm91, %v89, %v86
    %v93 = vadd.f32 %v73, %v83
    %v94 = vadd.f32 %v74, %v92
    %v95 = vadd.f32 %v66, 1.0
    %v96 = vadd.f32 %v68, 1.0
    %vm97 = vcmp.ge.f32.partialorder %v57, 0.0
    %vm98 = vcmp.ge.f32.partialorder %v58, 0.0
    %v99 = vsel %vm97, 1.0, %v66
    %v100 = vsel %vm98, 1.0, %v68
    %v101 = vrcp.pop %v95
    %v102 = vmul.f32 %v99, %v101
    %v103 = vrcp.pop %v96
    %v104 = vmul.f32 %v100, %v103
    %v105 = vmul.f32 %v102, 2.0
    %v106 = vmul.f32 %v104, 2.0
    %v107 = vsub.f32 1.0, %v105
    %v108 = vsub.f32 1.0, %v106
    %v109 = vmul.f32 %v59, %v107
    %v110 = vmul.f32 %v60, %v108
    %v111 = vadd.f32 %v102, %v109
    %v112 = vadd.f32 %v104, %v110
    %v113 = vmax.f32 %v111, 0.0
    %v114 = vmax.f32 %v112, 0.0
    %v115 = vrsqrt.pop %v113
    %v116 = vmul.f32 %v113, %v115
    %vm117 = vcmp.eq.f32.partialorder %v113, inf
    %v118 = vsel %vm117, %v113, %v116
    %vm119 = vcmp.eq.f32.partialorder %v113, 0.0
    %v120 = vand.u32 %v113, 2147483648
    %v121 = vsel %vm119, %v120, %v118
    %v122 = vrsqrt.pop %v114
    %v123 = vmul.f32 %v114, %v122
    %vm124 = vcmp.eq.f32.partialorder %v114, inf
    %v125 = vsel %vm124, %v114, %v123
    %vm126 = vcmp.eq.f32.partialorder %v114, 0.0
    %v127 = vand.u32 %v114, 2147483648
    %v128 = vsel %vm126, %v127, %v125
    %v129 = vmul.f32 %v113, %v121
    %v130 = vmul.f32 %v114, %v128
    %v131 = vmul.f32 %v59, -0.5
    %v132 = vmul.f32 %v60, -0.5
    %v133 = vadd.f32 %v131, 0.75
    %v134 = vadd.f32 %v132, 0.75
    %v135 = vmul.f32 %v93, %v133
    %v136 = vmul.f32 %v94, %v134
    %v137 = vmul.f32 %v135, %v129
    %v138 = vmul.f32 %v136, %v130
    %v139 = vld [vmem:[#allocation2] sm:$0xff]
    %v140 = vadd.f32 %v137, %v138
    %v141 = vadd.f32 %v139, %v140
    %142 = vst [vmem:[#allocation2] sm:$0xff] %v141
    // Predicated region
    $region22: #{tpu_custom_call.1} parent=1 // pred_check
      %p143 = pneg %p52
    $region23: #{tpu_custom_call.1} parent=1 // pred_check_branch
      %145 = sbr.rel (%p143) target = $region25
    $region24: #{tpu_custom_call.1} parent=1 // pred_region
      %v146 = vld [vmem:[#allocation2] sm:$0xff]
      %147 = vst [vmem:[#allocation8] sm:$0xff] %v146
    $region25: #{tpu_custom_call.1} parent=1 // pred_fallthru
      _
    // Predicated region
    $region26: #{tpu_custom_call.1} parent=1 // pred_check
      _
    $region27: #{tpu_custom_call.1} parent=1 // pred_check_branch
      %149 = sbr.rel (0) target = $region29
    $region28: #{tpu_custom_call.1} parent=1 // pred_region
      %s151 = ssub.s32 128, 128
      %152 = vsyncadd [#allocation5], %s151
      %s154 = sshll.u32 [#allocation8], 4
      %s155 = int_to_ptr.vmem [resolvable:$true] %s154
      %157 = dma.vmem_to_hbm [thread:$0]  %s155, 128, %s2, [#allocation5]
    $region29: #{tpu_custom_call.1} parent=1 // pred_fallthru
      _
    // Predicated region
    $region30: #{tpu_custom_call.1} parent=1 // pred_check
      _
    $region31: #{tpu_custom_call.1} parent=1 // pred_check_branch
      %159 = sbr.rel (0) target = $region33
    $region32: #{tpu_custom_call.1} parent=1 // pred_region
      %160 = dma.done [#allocation5], 128
    $region33: #{tpu_custom_call.1} parent=1 // pred_fallthru
      _
    %161 = vsyncpa [#allocation4], 1
    %162 = vsyncpa [#allocation7], 1
    %163 = vsyncpa [#allocation5], 1

</llo_original>
